<compile_context>
chip_gen: v5e
topology: v5e:2x2
jax: 0.10.0
libtpu: 0.0.40
codegen_flags: <defaults>
</compile_context>

<pallas_src>
import functools

import jax
import jax.numpy as jnp
from jax.experimental import pallas as pl
from jax.experimental.pallas import tpu as pltpu

SMOOTHING = 0.01
ALPHA_INIT = 1.0


def _dfl_kernel(r, r_pad, t_len, n_time, n_freq, smoothing,
                alpha_ref, pred_hbm, tgt_hbm, dft_ref,
                total_ref, alpha_out_ref,
                xb_ref, acc_ref, tsum_ref):
    """One grid step = one K-tile of the DFT.

    pred_hbm/tgt_hbm : (R, T) f32 refs left in HBM (memory_space=pl.ANY)
    dft_ref          : (T, 2*K_TILE) bf16, columns = [cos_tile | -sin_tile]
    xb_ref           : (2*R_pad, T) bf16 scratch, filled once on tile 0
    acc_ref          : (3, R_pad, K_TILE) f32 = [|dmag|, dmag^2, t_mag^2] accums
    tsum_ref         : SMEM (1,) f32 = sum (p - t)^2 (computed once)
    """
    j = pl.program_id(0)
    n_j = pl.num_programs(0)

    # ---- one-time init: stage f32 operands, time loss, bf16 LHS scratch ----
    @pl.when(j == 0)
    def _init():
        acc_ref[...] = jnp.zeros_like(acc_ref)
        if r != r_pad:
            # Zero the pad rows once; they contribute nothing to any sum.
            xb_ref[...] = jnp.zeros_like(xb_ref)

        def stage(pbuf, tbuf, sem):
            cp_p = pltpu.make_async_copy(pred_hbm, pbuf, sem.at[0])
            cp_t = pltpu.make_async_copy(tgt_hbm, tbuf, sem.at[1])
            cp_p.start()
            cp_t.start()
            cp_p.wait()
            cp_t.wait()
            p = pbuf[...]
            t = tbuf[...]
            d = p - t
            tsum_ref[0] = jnp.sum(d * d)          # exact f32 time-domain SSE
            xb_ref[0:r, :] = p.astype(jnp.bfloat16)
            xb_ref[r_pad:r_pad + r, :] = t.astype(jnp.bfloat16)

        # f32 staging buffers live only for this init step (RAII scope).
        pl.run_scoped(stage,
                      pltpu.VMEM((r, t_len), jnp.float32),
                      pltpu.VMEM((r, t_len), jnp.float32),
                      pltpu.SemaphoreType.DMA((2,)))

    # ---- fused DFT matmul for this K-tile: one MXU dot for p&t, re&im ------
    xb = xb_ref[...]                                         # (2*R_pad, T) bf16
    res = jnp.dot(xb, dft_ref[...], preferred_element_type=jnp.float32)
    kt = res.shape[1] // 2
    re = res[:, :kt]
    im = res[:, kt:]
    # Epsilon keeps zero-padded DFT columns NaN-free even if sqrt lowers via
    # x * rsqrt(x); it is negligible (~1e-15 in magnitude) for valid columns
    # and cancels exactly in (p_mag - t_mag).
    mag = jnp.sqrt(re * re + im * im + 1e-30)                # (2*R_pad, K_TILE)
    p_mag = mag[:r_pad]
    t_mag = mag[r_pad:]
    md = p_mag - t_mag
    # Pure element-wise accumulation (VPU); no per-tile cross-lane reductions.
    acc_ref[0] += jnp.abs(md)
    acc_ref[1] += md * md
    acc_ref[2] += t_mag * t_mag

    # ---- finalize on the last K-tile ---------------------------------------
    @pl.when(j == n_j - 1)
    def _finalize():
        time_loss = tsum_ref[0] / n_time
        l1 = jnp.sum(acc_ref[0]) / n_freq
        sc = jnp.sqrt(jnp.sum(acc_ref[1])) / jnp.sqrt(jnp.sum(acc_ref[2]))
        freq_loss = 0.7 * l1 + 0.3 * sc
        alpha = alpha_ref[0]
        loss_ratio = freq_loss / (time_loss + 1e-6)
        new_alpha = (1.0 - smoothing) * alpha + smoothing * loss_ratio
        total_ref[0, 0] = time_loss * (1.0 - new_alpha) + freq_loss * new_alpha
        alpha_out_ref[0, 0] = new_alpha


@functools.lru_cache(maxsize=8)
def _rfft_dft_matrix(t_len, k_valid, k_pad, k_tile):
    """bf16 DFT matrix of shape (T, n_tiles * 2*K_TILE); per K-tile the columns
    are laid out as [cos(K_TILE) | -sin(K_TILE)].  Columns with k >= K_valid
    are zeroed."""
    n = jnp.arange(t_len, dtype=jnp.int32)[:, None]
    k = jnp.arange(k_pad, dtype=jnp.int32)[None, :]
    # Exact integer phase (n*k) mod T; exact while (T-1)*(K_pad-1) < 2^31
    # (i.e. T up to ~60k for rfft).
    # TODO(synk): for larger T use a split-multiply modular product or switch
    # to a two-stage Cooley-Tukey factorization of the DFT.
    phase = jnp.mod(n * k, t_len).astype(jnp.float32)
    angle = (2.0 * jnp.pi / float(t_len)) * phase
    kf = jnp.arange(k_pad, dtype=jnp.float32)[None, :]
    valid = kf < float(k_valid)
    cos_m = jnp.where(valid, jnp.cos(angle), 0.0)
    sin_m = jnp.where(valid, -jnp.sin(angle), 0.0)
    n_tiles = k_pad // k_tile
    cos_t = cos_m.reshape(t_len, n_tiles, k_tile)
    sin_t = sin_m.reshape(t_len, n_tiles, k_tile)
    dft = jnp.concatenate([cos_t, sin_t], axis=2).reshape(t_len, n_tiles * 2 * k_tile)
    return jax.device_put(dft.astype(jnp.bfloat16))


def dynamic_fourier_loss(pred, target, alpha, smoothing=SMOOTHING):
    """pred/target: (..., T) float32.  alpha: shape-(1,) float32.
    Returns (total_loss, new_alpha) as (1, 1) float32 arrays."""
    assert pred.shape == target.shape
    t_len = pred.shape[-1]
    r = 1
    for d in pred.shape[:-1]:
        r *= d
    r_pad = ((r + 7) // 8) * 8                 # sublane-align the LHS scratch

    k_valid = t_len // 2 + 1                   # rfft bins
    k128 = ((k_valid + 127) // 128) * 128      # lane-align

    # --- generation-aware VMEM budget & K-tile sizing ------------------------
    vmem_cap = 128 << 20                       # v5e/v6e default
    try:
        vmem_cap = int(getattr(pltpu.get_tpu_info(), "vmem_capacity_bytes",
                               vmem_cap))
    except Exception:
        pass
    # ~48 MiB on v7x (64 MiB physical), 96 MiB on v5e/v6e (128 MiB physical).
    vmem_budget = int(min(0.75 * vmem_cap, 96 << 20))
    vmem_budget = max(vmem_budget, 16 << 20)

    def _fits(kt):
        rhs = t_len * 2 * kt * 2                    # one bf16 DFT tile buffer
        lhs_bf16 = 2 * r_pad * t_len * 2            # resident bf16 LHS scratch
        lhs_f32 = 2 * r * t_len * 4                 # one-time f32 staging (run_scoped)
        acc = 3 * r_pad * kt * 4                    # frequency accumulators
        temps = 8 * (2 * r_pad) * (2 * kt) * 4      # dot result + elementwise temps
        return 2 * rhs + lhs_bf16 + lhs_f32 + acc + temps + (4 << 20) <= vmem_budget

    kt_cap = min(k128, 2048)
    kt_max = 128
    for kt in range(kt_cap, 127, -128):             # largest multiple of 128 that fits
        if _fits(kt):
            kt_max = kt
            break
    # TODO(synk): if even k_tile=128 does not fit (huge T), add an inner
    # "arbitrary" grid axis over T (the contraction dim) with a VMEM re/im
    # accumulator, or tile the row dim, instead of growing VMEM with T.
    # Re-balance the tile width so K_pad has minimal zero-padding waste.
    n_tiles = (k128 + kt_max - 1) // kt_max
    k_tile = (((k128 + n_tiles - 1) // n_tiles) + 127) // 128 * 128
    k_pad = n_tiles * k_tile

    pred2d = pred.reshape(r, t_len).astype(jnp.float32)
    tgt2d = target.reshape(r, t_len).astype(jnp.float32)
    dft = _rfft_dft_matrix(t_len, k_valid, k_pad, k_tile)

    kernel = functools.partial(
        _dfl_kernel, r, r_pad, t_len,
        float(r * t_len), float(r * k_valid), float(smoothing))

    grid_spec = pltpu.PrefetchScalarGridSpec(
        num_scalar_prefetch=1,                      # alpha -> SMEM
        grid=(n_tiles,),
        in_specs=[
            pl.BlockSpec(memory_space=pl.ANY),      # pred (R, T): stays in HBM
            pl.BlockSpec(memory_space=pl.ANY),      # target (R, T): stays in HBM
            pl.BlockSpec((t_len, 2 * k_tile), lambda j, a: (0, j)),   # DFT K-tile
        ],
        out_specs=(
            pl.BlockSpec((1, 1), lambda j, a: (0, 0),
                         memory_space=pltpu.MemorySpace.SMEM),
            pl.BlockSpec((1, 1), lambda j, a: (0, 0),
                         memory_space=pltpu.MemorySpace.SMEM),
        ),
        scratch_shapes=[
            pltpu.VMEM((2 * r_pad, t_len), jnp.bfloat16),   # bf16 LHS (filled once)
            pltpu.VMEM((3, r_pad, k_tile), jnp.float32),    # freq accumulators
            pltpu.SMEM((1,), jnp.float32),                  # time-domain SSE
        ],
    )

    total, new_alpha = pl.pallas_call(
        kernel,
        out_shape=(jax.ShapeDtypeStruct((1, 1), jnp.float32),
                   jax.ShapeDtypeStruct((1, 1), jnp.float32)),
        grid_spec=grid_spec,
        compiler_params=pltpu.CompilerParams(
            dimension_semantics=("arbitrary",),     # K axis is a reduction
            vmem_limit_bytes=vmem_budget),
    )(alpha.astype(jnp.float32), pred2d, tgt2d, dft)
    # TODO(synk): v7x megacore — add a leading "parallel" grid axis splitting
    # K-tiles across the two TensorCores with per-core partial sums combined in
    # the wrapper; gate on batch size (small 2R is HBM-bound already).
    # TODO(synk): for very long T, replace the dense (T x K) DFT matmul with a
    # two-stage Cooley-Tukey factorization; optionally evaluate an fp8 DFT
    # matrix on v7x behind a numerical-validation gate.
    return total, new_alpha


def _reference(pred, target, alpha, smoothing=SMOOTHING):
    """Pure-JAX reference mirroring the PyTorch module."""
    time_loss = jnp.mean((pred - target) ** 2)
    p_mag = jnp.abs(jnp.fft.rfft(pred, axis=-1))
    t_mag = jnp.abs(jnp.fft.rfft(target, axis=-1))
    sc = jnp.linalg.norm(p_mag - t_mag) / jnp.linalg.norm(t_mag)
    freq_loss = 0.7 * jnp.mean(jnp.abs(p_mag - t_mag)) + 0.3 * sc
    loss_ratio = freq_loss / (time_loss + 1e-6)
    new_alpha = (1 - smoothing) * alpha[0] + smoothing * loss_ratio
    total = time_loss * (1 - new_alpha) + freq_loss * new_alpha
    return total, new_alpha


if __name__ == "__main__":
    B, C, T = 2, 4, 128
    key = jax.random.PRNGKey(0)
    k1, k2 = jax.random.split(key)
    pred = jax.random.normal(k1, (B, C, T), dtype=jnp.float32)
    target = jax.random.normal(k2, (B, C, T), dtype=jnp.float32)
    alpha = jnp.array([ALPHA_INIT], dtype=jnp.float32)

    total, new_alpha = dynamic_fourier_loss(pred, target, alpha)
    total = jax.block_until_ready(total)
    new_alpha = jax.block_until_ready(new_alpha)

    ref_total, ref_alpha = _reference(pred, target, alpha)
    rel_t = abs(float(total[0, 0]) - float(ref_total)) / (abs(float(ref_total)) + 1e-8)
    rel_a = abs(float(new_alpha[0, 0]) - float(ref_alpha)) / (abs(float(ref_alpha)) + 1e-8)
    # Loose tolerance: the DFT matmul runs in bf16 on the MXU.
    assert rel_t < 2e-2 and rel_a < 2e-2, (rel_t, rel_a)

    print("KERNEL_OK")
</pallas_src>

<mosaic_0001>
module attributes {stable_mosaic.version = 11 : i64} {
  func.func @_dfl_kernel(%arg0: i32, %arg1: memref<1xf32, #tpu.memory_space<smem>>, %arg2: memref<8x128xf32, #tpu.memory_space<any>>, %arg3: memref<8x128xf32, #tpu.memory_space<any>>, %arg4: memref<128x256xbf16, #tpu.memory_space<vmem>>, %arg5: memref<1x1xf32, #tpu.memory_space<smem>>, %arg6: memref<1x1xf32, #tpu.memory_space<smem>>, %arg7: memref<16x128xbf16, #tpu.memory_space<vmem>>, %arg8: memref<3x8x128xf32, #tpu.memory_space<vmem>>, %arg9: memref<1xf32, #tpu.memory_space<smem>>) attributes {dimension_semantics = [#tpu.dimension_semantics<arbitrary>], iteration_bounds = array<i64: 1>, scalar_prefetch = 1 : i64, scratch_operands = 3 : i64, tpu.core_type = #tpu.core_type<tc>, window_params = [{}, {}, {transform_indices = @transform_2, window_bounds = array<i64: 128, 256>}, {transform_indices = @transform_3, window_bounds = array<i64: 1, 1>}, {transform_indices = @transform_4, window_bounds = array<i64: 1, 1>}]} {
    %c0_i32 = arith.constant 0 : i32
    %0 = arith.cmpi eq, %arg0, %c0_i32 : i32
    %1 = arith.extui %0 : i1 to i32
    %c0_i32_0 = arith.constant 0 : i32
    %2 = arith.cmpi ne, %1, %c0_i32_0 : i32
    scf.if %2 {
      %cst_23 = arith.constant 0.000000e+00 : f32
      %41 = vector.broadcast %cst_23 : f32 to vector<3x8x128xf32>
      %c0_24 = arith.constant 0 : index
      %c0_25 = arith.constant 0 : index
      %c0_26 = arith.constant 0 : index
      %42 = vector.load %arg8[%c0_24, %c0_25, %c0_26] : memref<3x8x128xf32, #tpu.memory_space<vmem>>, vector<3x8x128xf32>
      tpu.vector_store %arg8[%c0_24, %c0_25, %c0_26], %41 {strides = array<i32>} : memref<3x8x128xf32, #tpu.memory_space<vmem>>, vector<3x8x128xf32>,
      "tpu.region"() ({
        %alloca = memref.alloca() : memref<8x128xf32, #tpu.memory_space<vmem>>
        %alloca_27 = memref.alloca() : memref<8x128xf32, #tpu.memory_space<vmem>>
        %43 = tpu.sem_alloc : memref<2x!tpu.dma_semaphore, #tpu.memory_space<semaphore_mem>>
        %c0_i32_28 = arith.constant 0 : i32
        %44 = tpu.memref_slice %43[%c0_i32_28] : memref<2x!tpu.dma_semaphore, #tpu.memory_space<semaphore_mem>> -> memref<1x!tpu.dma_semaphore, #tpu.memory_space<semaphore_mem>>
        %45 = tpu.memref_squeeze %44 : memref<1x!tpu.dma_semaphore, #tpu.memory_space<semaphore_mem>> -> memref<!tpu.dma_semaphore, #tpu.memory_space<semaphore_mem>>
        tpu.enqueue_dma source(%arg2 : memref<8x128xf32, #tpu.memory_space<any>>) target(%alloca : memref<8x128xf32, #tpu.memory_space<vmem>>) target_semaphore(%45 : memref<!tpu.dma_semaphore, #tpu.memory_space<semaphore_mem>>)
        %c1_i32 = arith.constant 1 : i32
        %46 = tpu.memref_slice %43[%c1_i32] : memref<2x!tpu.dma_semaphore, #tpu.memory_space<semaphore_mem>> -> memref<1x!tpu.dma_semaphore, #tpu.memory_space<semaphore_mem>>
        %47 = tpu.memref_squeeze %46 : memref<1x!tpu.dma_semaphore, #tpu.memory_space<semaphore_mem>> -> memref<!tpu.dma_semaphore, #tpu.memory_space<semaphore_mem>>
        tpu.enqueue_dma source(%arg3 : memref<8x128xf32, #tpu.memory_space<any>>) target(%alloca_27 : memref<8x128xf32, #tpu.memory_space<vmem>>) target_semaphore(%47 : memref<!tpu.dma_semaphore, #tpu.memory_space<semaphore_mem>>)
        %c0_i32_29 = arith.constant 0 : i32
        %48 = tpu.memref_slice %43[%c0_i32_29] : memref<2x!tpu.dma_semaphore, #tpu.memory_space<semaphore_mem>> -> memref<1x!tpu.dma_semaphore, #tpu.memory_space<semaphore_mem>>
        %49 = tpu.memref_squeeze %48 : memref<1x!tpu.dma_semaphore, #tpu.memory_space<semaphore_mem>> -> memref<!tpu.dma_semaphore, #tpu.memory_space<semaphore_mem>>
        tpu.wait_dma2 semaphore(%49 : memref<!tpu.dma_semaphore, #tpu.memory_space<semaphore_mem>>) src(%arg2 : memref<8x128xf32, #tpu.memory_space<any>>) dst(%alloca : memref<8x128xf32, #tpu.memory_space<vmem>>)
        %c1_i32_30 = arith.constant 1 : i32
        %50 = tpu.memref_slice %43[%c1_i32_30] : memref<2x!tpu.dma_semaphore, #tpu.memory_space<semaphore_mem>> -> memref<1x!tpu.dma_semaphore, #tpu.memory_space<semaphore_mem>>
        %51 = tpu.memref_squeeze %50 : memref<1x!tpu.dma_semaphore, #tpu.memory_space<semaphore_mem>> -> memref<!tpu.dma_semaphore, #tpu.memory_space<semaphore_mem>>
        tpu.wait_dma2 semaphore(%51 : memref<!tpu.dma_semaphore, #tpu.memory_space<semaphore_mem>>) src(%arg3 : memref<8x128xf32, #tpu.memory_space<any>>) dst(%alloca_27 : memref<8x128xf32, #tpu.memory_space<vmem>>)
        %c0_31 = arith.constant 0 : index
        %c0_32 = arith.constant 0 : index
        %52 = vector.load %alloca[%c0_31, %c0_32] : memref<8x128xf32, #tpu.memory_space<vmem>>, vector<8x128xf32>
        %c0_33 = arith.constant 0 : index
        %c0_34 = arith.constant 0 : index
        %53 = vector.load %alloca_27[%c0_33, %c0_34] : memref<8x128xf32, #tpu.memory_space<vmem>>, vector<8x128xf32>
        %54 = arith.subf %52, %53 : vector<8x128xf32>
        %55 = arith.mulf %54, %54 : vector<8x128xf32>
        %56 = vector.shape_cast %55 : vector<8x128xf32> to vector<1x8x128xf32>
        %cst_35 = arith.constant dense<0.000000e+00> : vector<1xf32>
        %57 = vector.multi_reduction <add>, %56, %cst_35 [1, 2] : vector<1x8x128xf32> to vector<1xf32>
        %58 = vector.shape_cast %57 : vector<1xf32> to vector<1x1x1xf32>
        %59 = vector.extract %58[0, 0, 0] : f32 from vector<1x1x1xf32>
        %c0_36 = arith.constant 0 : index
        %60 = memref.load %arg9[%c0_36] : memref<1xf32, #tpu.memory_space<smem>>
        memref.store %59, %arg9[%c0_36] : memref<1xf32, #tpu.memory_space<smem>>
        %61 = arith.truncf %52 : vector<8x128xf32> to vector<8x128xbf16>
        %c0_37 = arith.constant 0 : index
        %c0_38 = arith.constant 0 : index
        %62 = vector.load %arg7[%c0_37, %c0_38] : memref<16x128xbf16, #tpu.memory_space<vmem>>, vector<8x128xbf16>
        tpu.vector_store %arg7[%c0_37, %c0_38], %61 {strides = array<i32>} : memref<16x128xbf16, #tpu.memory_space<vmem>>, vector<8x128xbf16>,
        %63 = arith.truncf %53 : vector<8x128xf32> to vector<8x128xbf16>
        %c8 = arith.constant 8 : index
        %c0_39 = arith.constant 0 : index
        %64 = vector.load %arg7[%c8, %c0_39] : memref<16x128xbf16, #tpu.memory_space<vmem>>, vector<8x128xbf16>
        tpu.vector_store %arg7[%c8, %c0_39], %63 {strides = array<i32>} : memref<16x128xbf16, #tpu.memory_space<vmem>>, vector<8x128xbf16>,
        tpu.yield
      }) : () -> ()
    } else {
    }
    %c0 = arith.constant 0 : index
    %c0_1 = arith.constant 0 : index
    %3 = vector.load %arg7[%c0, %c0_1] : memref<16x128xbf16, #tpu.memory_space<vmem>>, vector<16x128xbf16>
    %c0_2 = arith.constant 0 : index
    %c0_3 = arith.constant 0 : index
    %4 = vector.load %arg4[%c0_2, %c0_3] : memref<128x256xbf16, #tpu.memory_space<vmem>>, vector<128x256xbf16>
    %cst = arith.constant dense<0.000000e+00> : vector<16x256xf32>
    %5 = tpu.matmul %3, %4, %cst {dimension_numbers = #tpu.dot_dimension_numbers<[1], [0], [0], [1], [0, 0, 1, 1], [], []>} : vector<16x128xbf16>, vector<128x256xbf16>, vector<16x256xf32> -> vector<16x256xf32>
    %6 = vector.extract_strided_slice %5 {offsets = [0, 0], sizes = [16, 128], strides = [1, 1]} : vector<16x256xf32> to vector<16x128xf32>
    %7 = vector.extract_strided_slice %5 {offsets = [0, 128], sizes = [16, 128], strides = [1, 1]} : vector<16x256xf32> to vector<16x128xf32>
    %8 = arith.mulf %6, %6 : vector<16x128xf32>
    %9 = arith.mulf %7, %7 : vector<16x128xf32>
    %10 = arith.addf %8, %9 : vector<16x128xf32>
    %cst_4 = arith.constant 1.000000e-30 : f32
    %11 = vector.broadcast %cst_4 : f32 to vector<16x128xf32>
    %12 = arith.addf %10, %11 : vector<16x128xf32>
    %13 = math.sqrt %12 : vector<16x128xf32>
    %14 = vector.extract_strided_slice %13 {offsets = [0, 0], sizes = [8, 128], strides = [1, 1]} : vector<16x128xf32> to vector<8x128xf32>
    %15 = vector.extract_strided_slice %13 {offsets = [8, 0], sizes = [8, 128], strides = [1, 1]} : vector<16x128xf32> to vector<8x128xf32>
    %16 = arith.subf %14, %15 : vector<8x128xf32>
    %c0_5 = arith.constant 0 : index
    %c0_6 = arith.constant 0 : index
    %c0_7 = arith.constant 0 : index
    %17 = vector.load %arg8[%c0_5, %c0_6, %c0_7] : memref<3x8x128xf32, #tpu.memory_space<vmem>>, vector<1x8x128xf32>
    %18 = vector.shape_cast %17 : vector<1x8x128xf32> to vector<8x128xf32>
    %19 = math.absf %16 : vector<8x128xf32>
    %20 = arith.addf %18, %19 : vector<8x128xf32>
    %c0_8 = arith.constant 0 : index
    %c0_9 = arith.constant 0 : index
    %c0_10 = arith.constant 0 : index
    %21 = vector.load %arg8[%c0_8, %c0_9, %c0_10] : memref<3x8x128xf32, #tpu.memory_space<vmem>>, vector<1x8x128xf32>
    %22 = vector.shape_cast %21 : vector<1x8x128xf32> to vector<8x128xf32>
    %23 = vector.shape_cast %20 : vector<8x128xf32> to vector<1x8x128xf32>
    tpu.vector_store %arg8[%c0_8, %c0_9, %c0_10], %23 {strides = array<i32>} : memref<3x8x128xf32, #tpu.memory_space<vmem>>, vector<1x8x128xf32>,
    %c1 = arith.constant 1 : index
    %c0_11 = arith.constant 0 : index
    %c0_12 = arith.constant 0 : index
    %24 = vector.load %arg8[%c1, %c0_11, %c0_12] : memref<3x8x128xf32, #tpu.memory_space<vmem>>, vector<1x8x128xf32>
    %25 = vector.shape_cast %24 : vector<1x8x128xf32> to vector<8x128xf32>
    %26 = arith.mulf %16, %16 : vector<8x128xf32>
    %27 = arith.addf %25, %26 : vector<8x128xf32>
    %c1_13 = arith.constant 1 : index
    %c0_14 = arith.constant 0 : index
    %c0_15 = arith.constant 0 : index
    %28 = vector.load %arg8[%c1_13, %c0_14, %c0_15] : memref<3x8x128xf32, #tpu.memory_space<vmem>>, vector<1x8x128xf32>
    %29 = vector.shape_cast %28 : vector<1x8x128xf32> to vector<8x128xf32>
    %30 = vector.shape_cast %27 : vector<8x128xf32> to vector<1x8x128xf32>
    tpu.vector_store %arg8[%c1_13, %c0_14, %c0_15], %30 {strides = array<i32>} : memref<3x8x128xf32, #tpu.memory_space<vmem>>, vector<1x8x128xf32>,
    %c2 = arith.constant 2 : index
    %c0_16 = arith.constant 0 : index
    %c0_17 = arith.constant 0 : index
    %31 = vector.load %arg8[%c2, %c0_16, %c0_17] : memref<3x8x128xf32, #tpu.memory_space<vmem>>, vector<1x8x128xf32>
    %32 = vector.shape_cast %31 : vector<1x8x128xf32> to vector<8x128xf32>
    %33 = arith.mulf %15, %15 : vector<8x128xf32>
    %34 = arith.addf %32, %33 : vector<8x128xf32>
    %c2_18 = arith.constant 2 : index
    %c0_19 = arith.constant 0 : index
    %c0_20 = arith.constant 0 : index
    %35 = vector.load %arg8[%c2_18, %c0_19, %c0_20] : memref<3x8x128xf32, #tpu.memory_space<vmem>>, vector<1x8x128xf32>
    %36 = vector.shape_cast %35 : vector<1x8x128xf32> to vector<8x128xf32>
    %37 = vector.shape_cast %34 : vector<8x128xf32> to vector<1x8x128xf32>
    tpu.vector_store %arg8[%c2_18, %c0_19, %c0_20], %37 {strides = array<i32>} : memref<3x8x128xf32, #tpu.memory_space<vmem>>, vector<1x8x128xf32>,
    %c0_i32_21 = arith.constant 0 : i32
    %38 = arith.cmpi eq, %arg0, %c0_i32_21 : i32
    %39 = arith.extui %38 : i1 to i32
    %c0_i32_22 = arith.constant 0 : i32
    %40 = arith.cmpi ne, %39, %c0_i32_22 : i32
    scf.if %40 {
      %c0_23 = arith.constant 0 : index
      %41 = memref.load %arg9[%c0_23] : memref<1xf32, #tpu.memory_space<smem>>
      %cst_24 = arith.constant 1.024000e+03 : f32
      %42 = arith.divf %41, %cst_24 : f32
      %c0_25 = arith.constant 0 : index
      %c0_26 = arith.constant 0 : index
      %c0_27 = arith.constant 0 : index
      %43 = vector.load %arg8[%c0_25, %c0_26, %c0_27] : memref<3x8x128xf32, #tpu.memory_space<vmem>>, vector<1x8x128xf32>
      %44 = vector.shape_cast %43 : vector<1x8x128xf32> to vector<8x128xf32>
      %45 = vector.shape_cast %44 : vector<8x128xf32> to vector<1x8x128xf32>
      %cst_28 = arith.constant dense<0.000000e+00> : vector<1xf32>
      %46 = vector.multi_reduction <add>, %45, %cst_28 [1, 2] : vector<1x8x128xf32> to vector<1xf32>
      %47 = vector.shape_cast %46 : vector<1xf32> to vector<1x1x1xf32>
      %48 = vector.extract %47[0, 0, 0] : f32 from vector<1x1x1xf32>
      %cst_29 = arith.constant 5.200000e+02 : f32
      %49 = arith.divf %48, %cst_29 : f32
      %c1_30 = arith.constant 1 : index
      %c0_31 = arith.constant 0 : index
      %c0_32 = arith.constant 0 : index
      %50 = vector.load %arg8[%c1_30, %c0_31, %c0_32] : memref<3x8x128xf32, #tpu.memory_space<vmem>>, vector<1x8x128xf32>
      %51 = vector.shape_cast %50 : vector<1x8x128xf32> to vector<8x128xf32>
      %52 = vector.shape_cast %51 : vector<8x128xf32> to vector<1x8x128xf32>
      %cst_33 = arith.constant dense<0.000000e+00> : vector<1xf32>
      %53 = vector.multi_reduction <add>, %52, %cst_33 [1, 2] : vector<1x8x128xf32> to vector<1xf32>
      %54 = vector.shape_cast %53 : vector<1xf32> to vector<1x1x1xf32>
      %55 = vector.extract %54[0, 0, 0] : f32 from vector<1x1x1xf32>
      %56 = math.sqrt %55 : f32
      %c2_34 = arith.constant 2 : index
      %c0_35 = arith.constant 0 : index
      %c0_36 = arith.constant 0 : index
      %57 = vector.load %arg8[%c2_34, %c0_35, %c0_36] : memref<3x8x128xf32, #tpu.memory_space<vmem>>, vector<1x8x128xf32>
      %58 = vector.shape_cast %57 : vector<1x8x128xf32> to vector<8x128xf32>
      %59 = vector.shape_cast %58 : vector<8x128xf32> to vector<1x8x128xf32>
      %cst_37 = arith.constant dense<0.000000e+00> : vector<1xf32>
      %60 = vector.multi_reduction <add>, %59, %cst_37 [1, 2] : vector<1x8x128xf32> to vector<1xf32>
      %61 = vector.shape_cast %60 : vector<1xf32> to vector<1x1x1xf32>
      %62 = vector.extract %61[0, 0, 0] : f32 from vector<1x1x1xf32>
      %63 = math.sqrt %62 : f32
      %64 = arith.divf %56, %63 : f32
      %cst_38 = arith.constant 0.699999988 : f32
      %65 = arith.mulf %cst_38, %49 : f32
      %cst_39 = arith.constant 3.000000e-01 : f32
      %66 = arith.mulf %cst_39, %64 : f32
      %67 = arith.addf %65, %66 : f32
      %c0_40 = arith.constant 0 : index
      %68 = memref.load %arg1[%c0_40] : memref<1xf32, #tpu.memory_space<smem>>
      %cst_41 = arith.constant 9.99999997E-7 : f32
      %69 = arith.addf %42, %cst_41 : f32
      %70 = arith.divf %67, %69 : f32
      %cst_42 = arith.constant 9.900000e-01 : f32
      %71 = arith.mulf %cst_42, %68 : f32
      %cst_43 = arith.constant 0.00999999977 : f32
      %72 = arith.mulf %cst_43, %70 : f32
      %73 = arith.addf %71, %72 : f32
      %cst_44 = arith.constant 1.000000e+00 : f32
      %74 = arith.subf %cst_44, %73 : f32
      %75 = arith.mulf %42, %74 : f32
      %76 = arith.mulf %67, %73 : f32
      %77 = arith.addf %75, %76 : f32
      %c0_45 = arith.constant 0 : index
      %c0_46 = arith.constant 0 : index
      %78 = memref.load %arg5[%c0_45, %c0_46] : memref<1x1xf32, #tpu.memory_space<smem>>
      memref.store %77, %arg5[%c0_45, %c0_46] : memref<1x1xf32, #tpu.memory_space<smem>>
      %c0_47 = arith.constant 0 : index
      %c0_48 = arith.constant 0 : index
      %79 = memref.load %arg6[%c0_47, %c0_48] : memref<1x1xf32, #tpu.memory_space<smem>>
      memref.store %73, %arg6[%c0_47, %c0_48] : memref<1x1xf32, #tpu.memory_space<smem>>
    } else {
    }
    return
  }
  func.func @transform_2(%arg0: i32, %arg1: memref<1xf32, #tpu.memory_space<smem>>) -> (i32, i32) {
    %c0_i32 = arith.constant 0 : i32
    %c0_i32_0 = arith.constant 0 : i32
    return %c0_i32, %arg0 : i32, i32
  }
  func.func @transform_3(%arg0: i32, %arg1: memref<1xf32, #tpu.memory_space<smem>>) -> (i32, i32) {
    %c0_i32 = arith.constant 0 : i32
    %c0_i32_0 = arith.constant 0 : i32
    %c0_i32_1 = arith.constant 0 : i32
    return %c0_i32, %c0_i32_0 : i32, i32
  }
  func.func @transform_4(%arg0: i32, %arg1: memref<1xf32, #tpu.memory_space<smem>>) -> (i32, i32) {
    %c0_i32 = arith.constant 0 : i32
    %c0_i32_0 = arith.constant 0 : i32
    %c0_i32_1 = arith.constant 0 : i32
    return %c0_i32, %c0_i32_0 : i32, i32
  }
}

</mosaic_0001>

<llo_original>
// kernel: tpu_custom_call.1
$region0: #{tpu_custom_call.1}
  #allocation0 [shape = 'u32[]', space=smem, size = 0x4, offset = 0x4, fixed_abs, tag = 'smem constant byte address 0x4 - core index']
  #allocation1 [shape = 'u32[72,128]{1,0:T(1,128)}', space=vmem, size = 0x9000, scoped, tag = 'internal scratch']
  #allocation2 [shape = 'bf16[16,128]{1,0:T(8,128)(2,1)}', space=vmem, size = 0x1000, scoped, tag = 'scratch operand']
  #allocation3 [shape = 'f32[3,8,128]{2,1,0:T(8,128)}', space=vmem, size = 0x3000, scoped, tag = 'scratch operand']
  #allocation4 [shape = 'f32[1]{0:T(128)}', space=smem, size = 0x200, scoped, tag = 'scratch operand']
  #allocation5 [shape = 's32[1]{0}', space=sflag, size = 0x4, scoped, tag = 'scoped memory for tpu_custom_call.1']
  #allocation6 [shape = 'f32[1]{0:T(128)S(6)}', space=smem, size = 0x200, scoped, tag = 'prefetched SMEM operand 0']
  #allocation16 [shape = 's32[]', space=sflag, size = 0x4, offset = 0, fixed_abs, tag = 'sflag constant byte address 0x0 - dummy sync flag']
  #allocation17 [shape = 's32[]', space=sflag, size = 0x4, offset = 0, fixed_abs, tag = 'sflag constant byte address 0x0 - dummy sync flag']
  #allocation18 [shape = 'u32[]', space=smem, size = 0x4, offset = 0x44, fixed_abs, tag = 'smem constant byte address 0x44 - assertion arg 0']
  #allocation19 [shape = 'u32[]', space=smem, size = 0x4, offset = 0x48, fixed_abs, tag = 'smem constant byte address 0x48 - assertion arg 1']
  #allocation20 [shape = 's32[]', space=sflag, size = 0x4, offset = 0, fixed_abs, tag = 'sflag constant byte address 0x0 - dummy sync flag']
  #allocation21 [shape = 's32[]', space=sflag, size = 0x4, offset = 0, fixed_abs, tag = 'sflag constant byte address 0x0 - dummy sync flag']
  %s0 = inlined_call_operand.<no memory space> [shape: f32[1], index: 0, kind: input, shape index: {}]
  %s1 = inlined_call_operand.hbm [shape: f32[8,128], index: 1, kind: input, shape index: {}]
  %s2 = inlined_call_operand.hbm [shape: f32[8,128], index: 2, kind: input, shape index: {}]
  %s3 = inlined_call_operand.hbm [shape: bf16[128,256], index: 3, kind: input, shape index: {}]
  %s4 = inlined_call_operand.hbm [shape: f32[1,1], index: 4, kind: output, shape index: {0}]
  %s5 = inlined_call_operand.hbm [shape: f32[1,1], index: 5, kind: output, shape index: {1}]
  %6 = xla_tuple %s4, %s5
  %s7 = sld [smem:[#allocation0]]
  $region43: #{tpu_custom_call.1} parent=0
    _
  %s9 = ssub.s32 1, %s7
  %s10 = scalar_select 0, %s9, %s7
  %11 = sst [smem:[#allocation6]] %s0
  $region1: #{tpu_custom_call.1} parent=0
    #allocation7 [shape = 'u8[65536]{0}', space=vmem, size = 0x10000, scoped, tag = 'input window, operand 3, single buffered']
    #allocation8 [shape = 's32[1]{0}', space=sflag, size = 0x4, scoped, tag = 'scoped memory for tpu_custom_call.1']
    #allocation9 [shape = 's32[1]{0}', space=sflag, size = 0x4, scoped, tag = 'scoped memory for tpu_custom_call.1']
    #allocation10 [shape = 'u8[512]{0}', space=smem, size = 0x200, scoped, tag = 'output window, operand 0, single buffered']
    #allocation11 [shape = 'u8[512]{0}', space=smem, size = 0x200, scoped, tag = 'output window, operand 1, single buffered']
    #allocation12 [shape = 's32[1]{0}', space=sflag, size = 0x4, scoped, tag = 'scoped memory for tpu_custom_call.1']
    %12 = vsyncpa [#allocation8], 0
    %13 = vsyncpa [#allocation9], 0
    %14 = vsyncpa [#allocation12], 0
    // Predicated region
    $region2: #{tpu_custom_call.1} parent=1 // pred_check
      _
    $region3: #{tpu_custom_call.1} parent=1 // pred_check_branch
      %16 = sbr.rel (0) target = $region5
    $region4: #{tpu_custom_call.1} parent=1 // pred_region
      %18 = vsyncadd [#allocation8], 0
      %s19 = sshll.u32 %s3, 4
      %s20 = int_to_ptr.hbm [resolvable:$true] %s19
      %s21 = sshll.u32 [#allocation7], 4
      %s22 = int_to_ptr.vmem [resolvable:$true] %s21
      %27 = dma.hbm_to_vmem [thread:$0]  %s20, 2048, %s22, [#allocation8], 128, 128, 8
    $region5: #{tpu_custom_call.1} parent=1 // pred_fallthru
      _
    // Predicated region
    $region6: #{tpu_custom_call.1} parent=1 // pred_check
      _
    $region7: #{tpu_custom_call.1} parent=1 // pred_check_branch
      %29 = sbr.rel (0) target = $region9
    $region8: #{tpu_custom_call.1} parent=1 // pred_region
      %31 = dma.done [#allocation8], 2048
    $region9: #{tpu_custom_call.1} parent=1 // pred_fallthru
      _
    %p32 = scmp.eq.s32.totalorder 0, 0
    // Predicated region
    $region10: #{tpu_custom_call.1} parent=1 // pred_check
      %p33 = pneg %p32
    $region11: #{tpu_custom_call.1} parent=1 // pred_check_branch
      %35 = sbr.rel (%p33) target = $region13
    $region12: #{tpu_custom_call.1} parent=1 // pred_region
      %36 = vst [vmem:[#allocation3] sm:$0xff] 0.0
      %37 = vst [vmem:[#allocation3 + $0x8] sm:$0xff] 0.0
      %38 = vst [vmem:[#allocation3 + $0x10] sm:$0xff] 0.0
      $region14: #{tpu_custom_call.1} parent=12
        #allocation13 [shape = 'u8[4096]{0}', space=vmem, size = 0x1000, scoped, tag = 'scoped memory for tpu_custom_call.1']
        #allocation14 [shape = 'u8[4096]{0}', space=vmem, size = 0x1000, scoped, tag = 'scoped memory for tpu_custom_call.1']
        #allocation15 [shape = 's32[2]{0}', space=sflag, size = 0x8, scoped, tag = 'scoped memory for tpu_custom_call.1']
        // Predicated region
        $region15: #{tpu_custom_call.1} parent=14 // pred_check
          _
        $region16: #{tpu_custom_call.1} parent=14 // pred_check_branch
          %40 = sbr.rel target = $region18
        $region17: #{tpu_custom_call.1} parent=14 // pred_region
          %41 = sst [smem:[#allocation18]] [#allocation17]
          %42 = sst [smem:[#allocation19]] [#allocation16]
        $region18: #{tpu_custom_call.1} parent=14 // pred_fallthru
          _
        %44 = shalt.err (0)
        %s46 = sshll.u32 %s1, 4
        %s47 = int_to_ptr.hbm [resolvable:$true] %s46
        %s48 = sshll.u32 [#allocation13], 4
        %s49 = int_to_ptr.vmem [resolvable:$true] %s48
        %51 = dma.hbm_to_vmem [thread:$0]  %s47, 128, %s49, [#allocation15]
        %s52 = scalar_lea.sflag [#allocation15], 1
        // Predicated region
        $region19: #{tpu_custom_call.1} parent=14 // pred_check
          _
        $region20: #{tpu_custom_call.1} parent=14 // pred_check_branch
          %54 = sbr.rel target = $region22
        $region21: #{tpu_custom_call.1} parent=14 // pred_region
          %55 = sst [smem:[#allocation18]] [#allocation21]
          %56 = sst [smem:[#allocation19]] [#allocation20]
        $region22: #{tpu_custom_call.1} parent=14 // pred_fallthru
          _
        %58 = shalt.err (0)
        %s60 = sshll.u32 %s2, 4
        %s61 = int_to_ptr.hbm [resolvable:$true] %s60
        %s62 = sshll.u32 [#allocation14], 4
        %s63 = int_to_ptr.vmem [resolvable:$true] %s62
        %65 = dma.hbm_to_vmem [thread:$0]  %s61, 128, %s63, %s52
        %s66 = smul.u32 8, 1
        %s67 = sshll.u32 %s66, 4
        %68 = dma.done [#allocation15], %s67
        %s69 = sshll.u32 %s66, 4
        %70 = dma.done %s52, %s69
        %v71 = vld [vmem:[#allocation13] sm:$0xff]
        %v72 = vld [vmem:[#allocation14] sm:$0xff]
        %v73 = vsub.f32 %v71, %v72
        %v74 = vmul.f32 %v73, %v73
        %75 = vadd.xlane.f32.xlu0 %v74
        %v76 = vpop.xlane.xlu0 %75
        %v77 = vrot.slane %v76, 4
        %v78 = vadd.f32 %v76, %v77
        %v79 = vrot.slane %v78, 2
        %v80 = vadd.f32 %v78, %v79
        %v81 = vrot.slane %v80, 1
        %v82 = vadd.f32 %v80, %v81
        %s83 = vtos %v82
        %s84 = scalar_lea.smem [#allocation4], 0
        %85 = sst [smem:[%s84]] %s83
        %v86 = vpack.c.bf16 %v71, %v71
        %87 = vst [vmem:[#allocation2] sm:$0xf] %v86
        %v88 = vpack.c.bf16 %v72, %v72
        %89 = vst [vmem:[#allocation2 + $0x4] sm:$0xf] %v88
    $region13: #{tpu_custom_call.1} parent=1 // pred_fallthru
      _
    %v90 = vld [vmem:[#allocation2] sm:$0xf]
    %v91 = vld [vmem:[#allocation2 + $0x4] sm:$0xf]
    %v92 = vld [vmem:[#allocation7] sm:$0xff]
    %v93 = vld [vmem:[#allocation7 + $0x8] sm:$0xff]
    %v94 = vld [vmem:[#allocation7 + $0x10] sm:$0xff]
    %v95 = vld [vmem:[#allocation7 + $0x18] sm:$0xff]
    %v96 = vld [vmem:[#allocation7 + $0x20] sm:$0xff]
    %v97 = vld [vmem:[#allocation7 + $0x28] sm:$0xff]
    %v98 = vld [vmem:[#allocation7 + $0x30] sm:$0xff]
    %v99 = vld [vmem:[#allocation7 + $0x38] sm:$0xff]
    %v100 = vld [vmem:[#allocation7 + $0x40] sm:$0xff]
    %v101 = vld [vmem:[#allocation7 + $0x48] sm:$0xff]
    %v102 = vld [vmem:[#allocation7 + $0x50] sm:$0xff]
    %v103 = vld [vmem:[#allocation7 + $0x58] sm:$0xff]
    %v104 = vld [vmem:[#allocation7 + $0x60] sm:$0xff]
    %v105 = vld [vmem:[#allocation7 + $0x68] sm:$0xff]
    %v106 = vld [vmem:[#allocation7 + $0x70] sm:$0xff]
    %v107 = vld [vmem:[#allocation7 + $0x78] sm:$0xff]
    %v110 = vunpack.c.l.b16 %v90
    %v111 = vunpack.c.l.b16 %v91
    %v112 = vpack.c.b16 %v111, %v110
    %v130 = vunpack.c.l.b16 %v92
    %v131 = vunpack.c.h.b16 %v92
    %v132 = vunpack.c.l.b16 %v93
    %v133 = vunpack.c.h.b16 %v93
    %v134 = vunpack.c.l.b16 %v94
    %v135 = vunpack.c.h.b16 %v94
    %v136 = vunpack.c.l.b16 %v95
    %v137 = vunpack.c.h.b16 %v95
    %v138 = vunpack.c.l.b16 %v96
    %v139 = vunpack.c.h.b16 %v96
    %v140 = vunpack.c.l.b16 %v97
    %v141 = vunpack.c.h.b16 %v97
    %v142 = vunpack.c.l.b16 %v98
    %v143 = vunpack.c.h.b16 %v98
    %v144 = vunpack.c.l.b16 %v99
    %v145 = vunpack.c.h.b16 %v99
    %v146 = vunpack.c.l.b16 %v100
    %v147 = vunpack.c.h.b16 %v100
    %v148 = vunpack.c.l.b16 %v101
    %v149 = vunpack.c.h.b16 %v101
    %v150 = vunpack.c.l.b16 %v102
    %v151 = vunpack.c.h.b16 %v102
    %v152 = vunpack.c.l.b16 %v103
    %v153 = vunpack.c.h.b16 %v103
    %v154 = vunpack.c.l.b16 %v104
    %v155 = vunpack.c.h.b16 %v104
    %v156 = vunpack.c.l.b16 %v105
    %v157 = vunpack.c.h.b16 %v105
    %v158 = vunpack.c.l.b16 %v106
    %v159 = vunpack.c.h.b16 %v106
    %v160 = vunpack.c.l.b16 %v107
    %v161 = vunpack.c.h.b16 %v107
    %v162 = vpack.c.b16 %v132, %v130
    %v163 = vpack.c.b16 %v133, %v131
    %v164 = vpack.c.b16 %v136, %v134
    %v165 = vpack.c.b16 %v137, %v135
    %v166 = vpack.c.b16 %v140, %v138
    %v167 = vpack.c.b16 %v141, %v139
    %v168 = vpack.c.b16 %v144, %v142
    %v169 = vpack.c.b16 %v145, %v143
    %v170 = vpack.c.b16 %v148, %v146
    %v171 = vpack.c.b16 %v149, %v147
    %v172 = vpack.c.b16 %v152, %v150
    %v173 = vpack.c.b16 %v153, %v151
    %v174 = vpack.c.b16 %v156, %v154
    %v175 = vpack.c.b16 %v157, %v155
    %v176 = vpack.c.b16 %v160, %v158
    %v177 = vpack.c.b16 %v161, %v159
    %194 = vmatpush.bf16.msra.mxu0 %v176
    %195 = vmatpush.bf16.msra.mxu0 %v174
    %196 = vmatpush.bf16.msra.mxu0 %v172
    %197 = vmatpush.bf16.msra.mxu0 %v170
    %198 = vmatpush.bf16.msra.mxu0 %v168
    %199 = vmatpush.bf16.msra.mxu0 %v166
    %200 = vmatpush.bf16.msra.mxu0 %v164
    %201 = vmatpush.bf16.msra.mxu0 %v162
    %202 = vmatmul.bf16.gmra.mxu0 %v112
    %v203 = vpop.f32.mrf.mxu0
    %v204 = vadd.f32 0.0, %v203
    %v205 = vpop.f32.mrf.mxu0
    %v206 = vadd.f32 0.0, %v205
    %207 = vdwg.mxu0
    %208 = vmatpush.bf16.msra.mxu0 %v177
    %209 = vmatpush.bf16.msra.mxu0 %v175
    %210 = vmatpush.bf16.msra.mxu0 %v173
    %211 = vmatpush.bf16.msra.mxu0 %v171
    %212 = vmatpush.bf16.msra.mxu0 %v169
    %213 = vmatpush.bf16.msra.mxu0 %v167
    %214 = vmatpush.bf16.msra.mxu0 %v165
    %215 = vmatpush.bf16.msra.mxu0 %v163
    %216 = vmatmul.bf16.gmra.mxu0 %v112
    %v217 = vpop.f32.mrf.mxu0
    %v218 = vadd.f32 0.0, %v217
    %v219 = vpop.f32.mrf.mxu0
    %v220 = vadd.f32 0.0, %v219
    %221 = vdwg.mxu0
    %v222 = vmul.f32 %v204, %v204
    %v223 = vmul.f32 %v206, %v206
    %v224 = vmul.f32 %v218, %v218
    %v225 = vmul.f32 %v220, %v220
    %v226 = vadd.f32 %v222, %v224
    %v227 = vadd.f32 %v223, %v225
    %v228 = vadd.f32 %v226, 1e-30
    %v229 = vadd.f32 %v227, 1e-30
    %v230 = vrsqrt.pop %v228
    %v231 = vmul.f32 %v230, %v228
    %v232 = vmul.f32 %v231, %v230
    %v233 = vmul.f32 0.5, %v232
    %v234 = vsub.f32 1.5, %v233
    %v235 = vmul.f32 %v230, %v234
    %v236 = vmul.f32 %v228, %v235
    %vm237 = vcmp.eq.f32.partialorder %v228, inf
    %v238 = vsel %vm237, %v228, %v236
    %vm239 = vcmp.eq.f32.partialorder %v228, 0.0
    %v240 = vand.u32 %v228, 2147483648
    %v241 = vsel %vm239, %v240, %v238
    %v242 = vrsqrt.pop %v229
    %v243 = vmul.f32 %v242, %v229
    %v244 = vmul.f32 %v243, %v242
    %v245 = vmul.f32 0.5, %v244
    %v246 = vsub.f32 1.5, %v245
    %v247 = vmul.f32 %v242, %v246
    %v248 = vmul.f32 %v229, %v247
    %vm249 = vcmp.eq.f32.partialorder %v229, inf
    %v250 = vsel %vm249, %v229, %v248
    %vm251 = vcmp.eq.f32.partialorder %v229, 0.0
    %v252 = vand.u32 %v229, 2147483648
    %v253 = vsel %vm251, %v252, %v250
    %v254 = vsub.f32 %v241, %v253
    %v255 = vld [vmem:[#allocation3] sm:$0xff]
    %v256 = vand.u32 2147483647, %v254
    %v257 = vadd.f32 %v255, %v256
    %258 = vst [vmem:[#allocation3] sm:$0xff] %v257
    %s259 = scalar_lea.vmem [#allocation3], 8
    %v260 = vld [vmem:[%s259] sm:$0xff]
    %v261 = vmul.f32 %v254, %v254
    %v262 = vadd.f32 %v260, %v261
    %263 = vst [vmem:[%s259] sm:$0xff] %v262
    %s264 = scalar_lea.vmem [#allocation3], 16
    %v265 = vld [vmem:[%s264] sm:$0xff]
    %v266 = vmul.f32 %v253, %v253
    %v267 = vadd.f32 %v265, %v266
    %268 = vst [vmem:[%s264] sm:$0xff] %v267
    // Predicated region
    $region23: #{tpu_custom_call.1} parent=1 // pred_check
      %p269 = pneg %p32
    $region24: #{tpu_custom_call.1} parent=1 // pred_check_branch
      %271 = sbr.rel (%p269) target = $region26
    $region25: #{tpu_custom_call.1} parent=1 // pred_region
      %s272 = sld [smem:[#allocation4]]
      %v273 = vrcp.pop 1024.0
      %v274 = vmul.f32 1024.0, %v273
      %v275 = vsub.f32 1.0, %v274
      %v276 = vmul.f32 %v273, %v275
      %v277 = vadd.f32 %v273, %v276
      %vm278 = vweird.f32 %v273
      %v279 = vsel %vm278, %v273, %v277
      %s280 = vtos %v279
      %s281 = smul.f32 %s272, %s280
      %v282 = vld [vmem:[#allocation3] sm:$0xff]
      %283 = vadd.xlane.f32.xlu0 %v282
      %v284 = vpop.xlane.xlu0 %283
      %v285 = vrot.slane %v284, 4
      %v286 = vadd.f32 %v284, %v285
      %v287 = vrot.slane %v286, 2
      %v288 = vadd.f32 %v286, %v287
      %v289 = vrot.slane %v288, 1
      %v290 = vadd.f32 %v288, %v289
      %s291 = vtos %v290
      %v292 = vrcp.pop 520.0
      %v293 = vmul.f32 520.0, %v292
      %v294 = vsub.f32 1.0, %v293
      %v295 = vmul.f32 %v292, %v294
      %v296 = vadd.f32 %v292, %v295
      %vm297 = vweird.f32 %v292
      %v298 = vsel %vm297, %v292, %v296
      %s299 = vtos %v298
      %s300 = smul.f32 %s291, %s299
      %v301 = vld [vmem:[%s259] sm:$0xff]
      %302 = vadd.xlane.f32.xlu0 %v301
      %v303 = vpop.xlane.xlu0 %302
      %v304 = vrot.slane %v303, 4
      %v305 = vadd.f32 %v303, %v304
      %v306 = vrot.slane %v305, 2
      %v307 = vadd.f32 %v305, %v306
      %v308 = vrot.slane %v307, 1
      %v309 = vadd.f32 %v307, %v308
      %s310 = vtos %v309
      %v311 = vstv %s310
      %v312 = vrsqrt.pop %v311
      %v313 = vmul.f32 %v312, %v311
      %v314 = vmul.f32 %v313, %v312
      %v315 = vmul.f32 0.5, %v314
      %v316 = vsub.f32 1.5, %v315
      %v317 = vmul.f32 %v312, %v316
      %v318 = vmul.f32 %v311, %v317
      %vm319 = vcmp.eq.f32.partialorder %v311, inf
      %v320 = vsel %vm319, %v311, %v318
      %vm321 = vcmp.eq.f32.partialorder %v311, 0.0
      %v322 = vand.u32 %v311, 2147483648
      %v323 = vsel %vm321, %v322, %v320
      %s324 = vtos %v323
      %v325 = vld [vmem:[%s264] sm:$0xff]
      %326 = vadd.xlane.f32.xlu0 %v325
      %v327 = vpop.xlane.xlu0 %326
      %v328 = vrot.slane %v327, 4
      %v329 = vadd.f32 %v327, %v328
      %v330 = vrot.slane %v329, 2
      %v331 = vadd.f32 %v329, %v330
      %v332 = vrot.slane %v331, 1
      %v333 = vadd.f32 %v331, %v332
      %s334 = vtos %v333
      %v335 = vstv %s334
      %v336 = vrsqrt.pop %v335
      %v337 = vmul.f32 %v336, %v335
      %v338 = vmul.f32 %v337, %v336
      %v339 = vmul.f32 0.5, %v338
      %v340 = vsub.f32 1.5, %v339
      %v341 = vmul.f32 %v336, %v340
      %v342 = vmul.f32 %v335, %v341
      %vm343 = vcmp.eq.f32.partialorder %v335, inf
      %v344 = vsel %vm343, %v335, %v342
      %vm345 = vcmp.eq.f32.partialorder %v335, 0.0
      %v346 = vand.u32 %v335, 2147483648
      %v347 = vsel %vm345, %v346, %v344
      %s348 = vtos %v347
      %v349 = vstv %s348
      %v350 = vrcp.pop %v349
      %v351 = vmul.f32 %v349, %v350
      %v352 = vsub.f32 1.0, %v351
      %v353 = vmul.f32 %v350, %v352
      %v354 = vadd.f32 %v350, %v353
      %vm355 = vweird.f32 %v349
      %vm356 = vweird.f32 %v350
      %vm357 = vmor %vm355, %vm356
      %v358 = vsel %vm357, %v350, %v354
      %v359 = vand.u32 2147483647, %v349
      %vm360 = vcmp.eq.f32.partialorder %v359, 8.507059e+37
      %v361 = vand.u32 %v349, 2147483648
      %v362 = vor.u32 1.1754944e-38, %v361
      %v363 = vsel %vm360, %v362, %v358
      %s364 = vtos %v363
      %s365 = smul.f32 %s324, %s364
      %s366 = smul.f32 %s300, 0.7
      %s367 = smul.f32 %s365, 0.3
      %s368 = sadd.f32 %s366, %s367
      %s369 = sld [smem:[#allocation6]]
      %s370 = sadd.f32 %s281, 1e-06
      %v371 = vstv %s370
      %v372 = vrcp.pop %v371
      %v373 = vmul.f32 %v371, %v372
      %v374 = vsub.f32 1.0, %v373
      %v375 = vmul.f32 %v372, %v374
      %v376 = vadd.f32 %v372, %v375
      %vm377 = vweird.f32 %v371
      %vm378 = vweird.f32 %v372
      %vm379 = vmor %vm377, %vm378
      %v380 = vsel %vm379, %v372, %v376
      %v381 = vand.u32 2147483647, %v371
      %vm382 = vcmp.eq.f32.partialorder %v381, 8.507059e+37
      %v383 = vand.u32 %v371, 2147483648
      %v384 = vor.u32 1.1754944e-38, %v383
      %v385 = vsel %vm382, %v384, %v380
      %s386 = vtos %v385
      %s387 = smul.f32 %s368, %s386
      %s388 = smul.f32 %s369, 0.99
      %s389 = smul.f32 %s387, 0.01
      %s390 = sadd.f32 %s388, %s389
      %s391 = ssub.f32 1.0, %s390
      %s392 = smul.f32 %s281, %s391
      %s393 = smul.f32 %s368, %s390
      %s394 = sadd.f32 %s392, %s393
      %s395 = scalar_lea.smem [#allocation10], 0
      %396 = sst [smem:[%s395]] %s394
      %s397 = scalar_lea.smem [#allocation11], 0
      %398 = sst [smem:[%s397]] %s390
    $region26: #{tpu_custom_call.1} parent=1 // pred_fallthru
      _
    // Predicated region
    $region27: #{tpu_custom_call.1} parent=1 // pred_check
      _
    $region28: #{tpu_custom_call.1} parent=1 // pred_check_branch
      %400 = sbr.rel (0) target = $region30
    $region29: #{tpu_custom_call.1} parent=1 // pred_region
      %402 = vsyncadd [#allocation9], 0
      %s404 = sshll.u32 %s4, 4
      %s405 = int_to_ptr.hbm [resolvable:$true] %s404
      %407 = dma.smem_to_hbm [#allocation10], 16, %s405, [#allocation9]
    $region30: #{tpu_custom_call.1} parent=1 // pred_fallthru
      _
    // Predicated region
    $region31: #{tpu_custom_call.1} parent=1 // pred_check
      _
    $region32: #{tpu_custom_call.1} parent=1 // pred_check_branch
      %409 = sbr.rel (0) target = $region34
    $region33: #{tpu_custom_call.1} parent=1 // pred_region
      %411 = vsyncadd [#allocation12], 0
      %s413 = sshll.u32 %s5, 4
      %s414 = int_to_ptr.hbm [resolvable:$true] %s413
      %416 = dma.smem_to_hbm [#allocation11], 16, %s414, [#allocation12]
    $region34: #{tpu_custom_call.1} parent=1 // pred_fallthru
      _
    // Predicated region
    $region35: #{tpu_custom_call.1} parent=1 // pred_check
      _
    $region36: #{tpu_custom_call.1} parent=1 // pred_check_branch
      %418 = sbr.rel (0) target = $region38
    $region37: #{tpu_custom_call.1} parent=1 // pred_region
      %420 = dma.done [#allocation9], 16
    $region38: #{tpu_custom_call.1} parent=1 // pred_fallthru
      _
    // Predicated region
    $region39: #{tpu_custom_call.1} parent=1 // pred_check
      _
    $region40: #{tpu_custom_call.1} parent=1 // pred_check_branch
      %422 = sbr.rel (0) target = $region42
    $region41: #{tpu_custom_call.1} parent=1 // pred_region
      %424 = dma.done [#allocation12], 16
    $region42: #{tpu_custom_call.1} parent=1 // pred_fallthru
      _
    %425 = sfence
    %426 = vsyncpa [#allocation8], 1
    %427 = vsyncpa [#allocation9], 1
    %428 = vsyncpa [#allocation12], 1

</llo_original>
